<compile_context>
chip_gen: v5e
topology: v5e:2x2
jax: 0.10.0
libtpu: 0.0.40
codegen_flags: <defaults>
</compile_context>

<pallas_src>
import functools

import jax
import jax.numpy as jnp
from jax import lax
from jax.experimental import pallas as pl
from jax.experimental.pallas import tpu as pltpu


def _round_up(x, m):
    return (x + m - 1) // m * m


def _vmem_capacity_bytes(default=64 << 20):
    """Physical VMEM of the local TPU generation (conservative default: v7x)."""
    try:
        info = pltpu.get_tpu_info()
        cap = getattr(info, "vmem_capacity_bytes", None)
        if cap:
            return int(cap)
    except Exception:
        pass
    return default


def _tile_channel_sum(x_tile, w_idx, tile_w, true_s, needs_mask):
    """Sum a (C, tile_w) spatial tile over lanes -> (C, 1) f32, masking lanes
    past the true spatial extent (only emitted when the tail is ragged)."""
    xt = x_tile.astype(jnp.float32)
    if needs_mask:
        lane = lax.broadcasted_iota(jnp.int32, xt.shape, 1)
        xt = jnp.where(w_idx * tile_w + lane < true_s, xt, 0.0)
    return jnp.sum(xt, axis=1, keepdims=True)


def _excite(mean, w1, w2):
    """FC1 -> ReLU -> FC2 -> sigmoid on a (C, 1) column."""
    h = jnp.maximum(jnp.dot(w1, mean, preferred_element_type=jnp.float32), 0.0)
    g = jnp.dot(w2, h, preferred_element_type=jnp.float32)
    return 1.0 / (1.0 + jnp.exp(-g))


# ----------------------------------------------------------------------------
# Pallas kernels
# ----------------------------------------------------------------------------

def fused_se_kernel(x_ref, w1_ref, w2_ref, o_ref, acc_ref,
                    *, inv_s, tile_w, true_s, needs_mask):
    """Fused squeeze + excite + scale over one batch element.

    x_ref:   (C, tile_w)  current spatial tile (channels on sublanes).
    w1_ref:  (Cr, C)      fc1 weight, VMEM-resident.
    w2_ref:  (C, Cr)      fc2 weight, VMEM-resident.
    o_ref:   (C, slab_w)  output slab, resident across the spatial grid axis;
                           tiles are staged into it, scaled in the epilogue,
                           written to HBM once per batch element.
    acc_ref: (C, 1) f32   running channel sum.
    """
    w = pl.program_id(1)
    xt = x_ref[...]                                          # (C, tile_w)

    part = _tile_channel_sum(xt, w, tile_w, true_s, needs_mask)

    @pl.when(w == 0)
    def _():
        acc_ref[...] = part

    @pl.when(w > 0)
    def _():
        acc_ref[...] += part

    # Stage the raw tile into the resident output slab (128-aligned offset).
    off = pl.multiple_of(w * tile_w, 128)
    o_ref[:, pl.ds(off, tile_w)] = xt

    @pl.when(w == pl.num_programs(1) - 1)
    def _():
        gate = _excite(acc_ref[...] * inv_s, w1_ref[...], w2_ref[...])  # (C, 1)
        o_ref[...] = (o_ref[...].astype(jnp.float32) * gate).astype(o_ref.dtype)


def squeeze_excite_kernel(x_ref, w1_ref, w2_ref, gate_ref,
                          *, inv_s, tile_w, true_s, needs_mask):
    """Fallback kernel 1: channel mean over spatial tiles + excitation.
    gate_ref (C, 1) doubles as the sum accumulator (resident output block)."""
    w = pl.program_id(1)
    part = _tile_channel_sum(x_ref[...], w, tile_w, true_s, needs_mask)

    @pl.when(w == 0)
    def _():
        gate_ref[...] = part

    @pl.when(w > 0)
    def _():
        gate_ref[...] += part

    @pl.when(w == pl.num_programs(1) - 1)
    def _():
        gate_ref[...] = _excite(gate_ref[...] * inv_s, w1_ref[...], w2_ref[...])


def scale_kernel(x_ref, gate_ref, o_ref):
    """Fallback kernel 2: o = x * gate, gate broadcast along lanes."""
    o_ref[...] = (x_ref[...].astype(jnp.float32) * gate_ref[...]).astype(o_ref.dtype)


# ----------------------------------------------------------------------------
# Wrapper
# ----------------------------------------------------------------------------

def se_layer_forward(params, x_nchw):
    B, C, H, W = x_nchw.shape
    S = H * W
    x3 = x_nchw.reshape(B, C, S)                 # NCHW -> (B, C, S): free view
    dtype = x_nchw.dtype
    esize = x_nchw.dtype.itemsize

    w1 = params["fc1_w"]                         # (Cr, C)
    w2 = params["fc2_w"]                         # (C, Cr)
    Cr = w1.shape[0]

    vmem_cap = _vmem_capacity_bytes()            # 128 MiB v5e/v6e, 64 MiB v7x
    vmem_limit = (vmem_cap * 3) // 4             # explicit scoped-VMEM limit
    weight_bytes = 4 * C * Cr * esize            # w1 + w2, double-buffered

    S128 = _round_up(S, 128)

    def pick_tile(budget_bytes):
        # Lane-dense spatial tile: multiple of 128, as big as the budget
        # allows, never larger than the (128-rounded) spatial extent.
        t = (budget_bytes // (C * esize)) // 128 * 128
        return max(128, min(t, S128))

    # ---------------- fused single-pass path ----------------
    tile_f = pick_tile(vmem_cap // 16)
    nw_f = pl.cdiv(S, tile_f)
    slab_w = nw_f * tile_f                       # VMEM slab width (>= S)
    fused_vmem = (2 * C * slab_w + 2 * C * tile_f) * esize \
        + weight_bytes + C * 128 * 4
    use_fused = fused_vmem <= vmem_cap // 2

    if use_fused:
        kern = functools.partial(
            fused_se_kernel, inv_s=1.0 / S, tile_w=tile_f,
            true_s=S, needs_mask=(S % tile_f) != 0)
        out = pl.pallas_call(
            kern,
            out_shape=jax.ShapeDtypeStruct((B, C, S), dtype),
            grid_spec=pltpu.PrefetchScalarGridSpec(
                num_scalar_prefetch=0,
                grid=(B, nw_f),
                in_specs=[
                    pl.BlockSpec((None, C, tile_f), lambda b, w: (b, 0, w)),
                    pl.BlockSpec((Cr, C), lambda b, w: (0, 0)),   # VMEM-resident
                    pl.BlockSpec((C, Cr), lambda b, w: (0, 0)),   # VMEM-resident
                ],
                out_specs=pl.BlockSpec((None, C, slab_w), lambda b, w: (b, 0, 0)),
                scratch_shapes=[pltpu.VMEM((C, 1), jnp.float32)],
            ),
            compiler_params=pltpu.CompilerParams(
                dimension_semantics=("parallel", "arbitrary"),
                vmem_limit_bytes=vmem_limit),
            cost_estimate=pl.CostEstimate(
                flops=2 * B * C * S + 4 * B * C * Cr,
                transcendentals=B * C,
                bytes_accessed=2 * B * C * S * esize + 2 * C * Cr * esize),
        )(x3, w1, w2)
        return out.reshape(B, C, H, W)

    # ---------------- fallback 2-kernel path (slab too large for VMEM) -------
    tile_b = pick_tile(vmem_cap // 8)
    nw_b = pl.cdiv(S, tile_b)
    needs_mask_b = (S % tile_b) != 0

    gate = pl.pallas_call(
        functools.partial(squeeze_excite_kernel, inv_s=1.0 / S, tile_w=tile_b,
                          true_s=S, needs_mask=needs_mask_b),
        out_shape=jax.ShapeDtypeStruct((B, C, 1), jnp.float32),
        grid_spec=pltpu.PrefetchScalarGridSpec(
            num_scalar_prefetch=0,
            grid=(B, nw_b),
            in_specs=[
                pl.BlockSpec((None, C, tile_b), lambda b, w: (b, 0, w)),
                pl.BlockSpec((Cr, C), lambda b, w: (0, 0)),
                pl.BlockSpec((C, Cr), lambda b, w: (0, 0)),
            ],
            out_specs=pl.BlockSpec((None, C, 1), lambda b, w: (b, 0, 0)),
        ),
        compiler_params=pltpu.CompilerParams(
            dimension_semantics=("parallel", "arbitrary"),
            vmem_limit_bytes=vmem_limit),
        cost_estimate=pl.CostEstimate(
            flops=B * C * S + 4 * B * C * Cr,
            transcendentals=B * C,
            bytes_accessed=B * C * S * esize + 2 * C * Cr * esize),
    )(x3, w1, w2)

    out = pl.pallas_call(
        scale_kernel,
        out_shape=jax.ShapeDtypeStruct((B, C, S), dtype),
        grid_spec=pltpu.PrefetchScalarGridSpec(
            num_scalar_prefetch=0,
            grid=(B, nw_b),
            in_specs=[
                pl.BlockSpec((None, C, tile_b), lambda b, w: (b, 0, w)),
                pl.BlockSpec((None, C, 1), lambda b, w: (b, 0, 0)),
            ],
            out_specs=pl.BlockSpec((None, C, tile_b), lambda b, w: (b, 0, w)),
        ),
        compiler_params=pltpu.CompilerParams(
            dimension_semantics=("parallel", "parallel"),
            vmem_limit_bytes=vmem_limit),
        cost_estimate=pl.CostEstimate(
            flops=B * C * S,
            transcendentals=0,
            bytes_accessed=2 * B * C * S * esize),
    )(x3, gate)
    return out.reshape(B, C, H, W)


# ----------------------------------------------------------------------------
# Parameters (PyTorch nn.Linear default init, bias=False) + pure-JAX reference
# ----------------------------------------------------------------------------

def init_params(key, channel, reduction=16):
    cr = channel // reduction
    k1, k2 = jax.random.split(key)
    b1 = 1.0 / (channel ** 0.5)   # fc1 fan_in = channel
    b2 = 1.0 / (cr ** 0.5)        # fc2 fan_in = channel // reduction
    return {
        "fc1_w": jax.random.uniform(k1, (cr, channel), jnp.float32, -b1, b1),
        "fc2_w": jax.random.uniform(k2, (channel, cr), jnp.float32, -b2, b2),
    }


def se_layer_reference(params, x):
    y = jnp.mean(x, axis=(2, 3))                              # (B, C)
    h = jnp.maximum(y @ params["fc1_w"].T, 0.0)               # (B, Cr)
    g = jax.nn.sigmoid(h @ params["fc2_w"].T)                 # (B, C)
    return x * g[:, :, None, None]


if __name__ == "__main__":
    key = jax.random.PRNGKey(0)
    k_param, k_x = jax.random.split(key, 2)

    # channel must be >= reduction so that channel // reduction >= 1
    B, C, H, W = 2, 64, 16, 16
    reduction = 16

    params = init_params(k_param, C, reduction)
    x = jax.random.normal(k_x, (B, C, H, W), jnp.float32)

    fwd = jax.jit(se_layer_forward)
    out = jax.block_until_ready(fwd(params, x))

    assert out.shape == (B, C, H, W), out.shape
    assert bool(jnp.isfinite(out).all())

    ref = se_layer_reference(params, x)
    max_err = float(jnp.max(jnp.abs(out - ref)))
    assert max_err < 1e-4, f"mismatch vs reference: {max_err}"

    print("KERNEL_OK")
</pallas_src>

<mosaic_0001>
module attributes {stable_mosaic.version = 11 : i64} {
  func.func @fused_se_kernel(%arg0: i32, %arg1: i32, %arg2: memref<1x64x256xf32, #tpu.memory_space<vmem>>, %arg3: memref<4x64xf32, #tpu.memory_space<vmem>>, %arg4: memref<64x4xf32, #tpu.memory_space<vmem>>, %arg5: memref<1x64x256xf32, #tpu.memory_space<vmem>>, %arg6: memref<64x1xf32, #tpu.memory_space<vmem>>) attributes {dimension_semantics = [#tpu.dimension_semantics<parallel>, #tpu.dimension_semantics<arbitrary>], iteration_bounds = array<i64: 2, 1>, scalar_prefetch = 0 : i64, scratch_operands = 1 : i64, tpu.core_type = #tpu.core_type<tc>, window_params = [{transform_indices = @transform_0, window_bounds = array<i64: 1, 64, 256>}, {pipeline_mode = #tpu.pipeline_mode<synchronous>, transform_indices = @transform_1, window_bounds = array<i64: 4, 64>}, {pipeline_mode = #tpu.pipeline_mode<synchronous>, transform_indices = @transform_2, window_bounds = array<i64: 64, 4>}, {transform_indices = @transform_3, window_bounds = array<i64: 1, 64, 256>}]} {
    %c0 = arith.constant 0 : index
    %c0_0 = arith.constant 0 : index
    %c0_1 = arith.constant 0 : index
    %0 = vector.load %arg2[%c0, %c0_0, %c0_1] : memref<1x64x256xf32, #tpu.memory_space<vmem>>, vector<1x64x256xf32>
    %1 = vector.shape_cast %0 : vector<1x64x256xf32> to vector<64x256xf32>
    %cst = arith.constant dense<0.000000e+00> : vector<64xf32>
    %2 = vector.multi_reduction <add>, %1, %cst [1] : vector<64x256xf32> to vector<64xf32>
    %3 = vector.shape_cast %2 : vector<64xf32> to vector<64x1xf32>
    %c0_i32 = arith.constant 0 : i32
    %4 = arith.cmpi eq, %arg1, %c0_i32 : i32
    %5 = arith.extui %4 : i1 to i32
    %c0_i32_2 = arith.constant 0 : i32
    %6 = arith.cmpi ne, %5, %c0_i32_2 : i32
    scf.if %6 {
      %c0_9 = arith.constant 0 : index
      %c0_10 = arith.constant 0 : index
      %19 = vector.load %arg6[%c0_9, %c0_10] : memref<64x1xf32, #tpu.memory_space<vmem>>, vector<64x1xf32>
      tpu.vector_store %arg6[%c0_9, %c0_10], %3 {strides = array<i32>} : memref<64x1xf32, #tpu.memory_space<vmem>>, vector<64x1xf32>,
    } else {
    }
    %c0_i32_3 = arith.constant 0 : i32
    %7 = arith.cmpi sgt, %arg1, %c0_i32_3 : i32
    %8 = arith.extui %7 : i1 to i32
    %c0_i32_4 = arith.constant 0 : i32
    %9 = arith.cmpi ne, %8, %c0_i32_4 : i32
    scf.if %9 {
      %c0_9 = arith.constant 0 : index
      %c0_10 = arith.constant 0 : index
      %19 = vector.load %arg6[%c0_9, %c0_10] : memref<64x1xf32, #tpu.memory_space<vmem>>, vector<64x1xf32>
      %20 = arith.addf %19, %3 : vector<64x1xf32>
      %c0_11 = arith.constant 0 : index
      %c0_12 = arith.constant 0 : index
      %21 = vector.load %arg6[%c0_11, %c0_12] : memref<64x1xf32, #tpu.memory_space<vmem>>, vector<64x1xf32>
      tpu.vector_store %arg6[%c0_11, %c0_12], %20 {strides = array<i32>} : memref<64x1xf32, #tpu.memory_space<vmem>>, vector<64x1xf32>,
    } else {
    }
    %c256_i32 = arith.constant 256 : i32
    %10 = arith.muli %arg1, %c256_i32 : i32
    %11 = tpu.assume_multiple %10, 128 : i32
    %c0_5 = arith.constant 0 : index
    %c0_6 = arith.constant 0 : index
    %12 = arith.index_cast %11 : i32 to index
    %13 = vector.load %arg5[%c0_5, %c0_6, %12] : memref<1x64x256xf32, #tpu.memory_space<vmem>>, vector<1x64x256xf32>
    %14 = vector.shape_cast %13 : vector<1x64x256xf32> to vector<64x256xf32>
    %15 = vector.shape_cast %1 : vector<64x256xf32> to vector<1x64x256xf32>
    tpu.vector_store %arg5[%c0_5, %c0_6, %12], %15 {strides = array<i32>} : memref<1x64x256xf32, #tpu.memory_space<vmem>>, vector<1x64x256xf32>,
    %c0_i32_7 = arith.constant 0 : i32
    %16 = arith.cmpi eq, %arg1, %c0_i32_7 : i32
    %17 = arith.extui %16 : i1 to i32
    %c0_i32_8 = arith.constant 0 : i32
    %18 = arith.cmpi ne, %17, %c0_i32_8 : i32
    scf.if %18 {
      %c0_9 = arith.constant 0 : index
      %c0_10 = arith.constant 0 : index
      %19 = vector.load %arg6[%c0_9, %c0_10] : memref<64x1xf32, #tpu.memory_space<vmem>>, vector<64x1xf32>
      %cst_11 = arith.constant 3.906250e-03 : f32
      %20 = vector.broadcast %cst_11 : f32 to vector<64x1xf32>
      %21 = arith.mulf %19, %20 : vector<64x1xf32>
      %c0_12 = arith.constant 0 : index
      %c0_13 = arith.constant 0 : index
      %22 = vector.load %arg3[%c0_12, %c0_13] : memref<4x64xf32, #tpu.memory_space<vmem>>, vector<4x64xf32>
      %c0_14 = arith.constant 0 : index
      %c0_15 = arith.constant 0 : index
      %23 = vector.load %arg4[%c0_14, %c0_15] : memref<64x4xf32, #tpu.memory_space<vmem>>, vector<64x4xf32>
      %cst_16 = arith.constant dense<0.000000e+00> : vector<4x1xf32>
      %24 = tpu.matmul %22, %21, %cst_16 {dimension_numbers = #tpu.dot_dimension_numbers<[1], [0], [0], [1], [0, 0, 1, 1], [], []>} : vector<4x64xf32>, vector<64x1xf32>, vector<4x1xf32> -> vector<4x1xf32>
      %cst_17 = arith.constant 0.000000e+00 : f32
      %25 = vector.broadcast %cst_17 : f32 to vector<4x1xf32>
      %26 = arith.maximumf %24, %25 : vector<4x1xf32>
      %cst_18 = arith.constant dense<0.000000e+00> : vector<64x1xf32>
      %27 = tpu.matmul %23, %26, %cst_18 {dimension_numbers = #tpu.dot_dimension_numbers<[1], [0], [0], [1], [0, 0, 1, 1], [], []>} : vector<64x4xf32>, vector<4x1xf32>, vector<64x1xf32> -> vector<64x1xf32>
      %cst_19 = arith.constant 0.000000e+00 : f32
      %28 = vector.broadcast %cst_19 : f32 to vector<64x1xf32>
      %29 = arith.subf %28, %27 : vector<64x1xf32>
      %30 = math.exp %29 : vector<64x1xf32>
      %cst_20 = arith.constant 1.000000e+00 : f32
      %31 = vector.broadcast %cst_20 : f32 to vector<64x1xf32>
      %32 = arith.addf %31, %30 : vector<64x1xf32>
      %cst_21 = arith.constant 1.000000e+00 : f32
      %33 = vector.broadcast %cst_21 : f32 to vector<64x1xf32>
      %34 = arith.divf %33, %32 : vector<64x1xf32>
      %c0_22 = arith.constant 0 : index
      %c0_23 = arith.constant 0 : index
      %c0_24 = arith.constant 0 : index
      %35 = vector.load %arg5[%c0_22, %c0_23, %c0_24] : memref<1x64x256xf32, #tpu.memory_space<vmem>>, vector<1x64x256xf32>
      %36 = vector.shape_cast %35 : vector<1x64x256xf32> to vector<64x256xf32>
      %37 = vector.broadcast %34 : vector<64x1xf32> to vector<64x256xf32>
      %38 = arith.mulf %36, %37 : vector<64x256xf32>
      %c0_25 = arith.constant 0 : index
      %c0_26 = arith.constant 0 : index
      %c0_27 = arith.constant 0 : index
      %39 = vector.load %arg5[%c0_25, %c0_26, %c0_27] : memref<1x64x256xf32, #tpu.memory_space<vmem>>, vector<1x64x256xf32>
      %40 = vector.shape_cast %39 : vector<1x64x256xf32> to vector<64x256xf32>
      %41 = vector.shape_cast %38 : vector<64x256xf32> to vector<1x64x256xf32>
      tpu.vector_store %arg5[%c0_25, %c0_26, %c0_27], %41 {strides = array<i32>} : memref<1x64x256xf32, #tpu.memory_space<vmem>>, vector<1x64x256xf32>,
    } else {
    }
    return
  }
  func.func @transform_0(%arg0: i32, %arg1: i32) -> (i32, i32, i32) {
    %c0_i32 = arith.constant 0 : i32
    %c0_i32_0 = arith.constant 0 : i32
    return %arg0, %c0_i32, %arg1 : i32, i32, i32
  }
  func.func @transform_1(%arg0: i32, %arg1: i32) -> (i32, i32) {
    %c0_i32 = arith.constant 0 : i32
    %c0_i32_0 = arith.constant 0 : i32
    %c0_i32_1 = arith.constant 0 : i32
    return %c0_i32, %c0_i32_0 : i32, i32
  }
  func.func @transform_2(%arg0: i32, %arg1: i32) -> (i32, i32) {
    %c0_i32 = arith.constant 0 : i32
    %c0_i32_0 = arith.constant 0 : i32
    %c0_i32_1 = arith.constant 0 : i32
    return %c0_i32, %c0_i32_0 : i32, i32
  }
  func.func @transform_3(%arg0: i32, %arg1: i32) -> (i32, i32, i32) {
    %c0_i32 = arith.constant 0 : i32
    %c0_i32_0 = arith.constant 0 : i32
    %c0_i32_1 = arith.constant 0 : i32
    return %arg0, %c0_i32, %c0_i32_0 : i32, i32, i32
  }
}

</mosaic_0001>

<llo_original>
// kernel: se_layer_forward.1
$region0: #{se_layer_forward.1}
  #allocation0 [shape = 'u32[]', space=smem, size = 0x4, offset = 0x4, fixed_abs, tag = 'smem constant byte address 0x4 - core index']
  #allocation1 [shape = 'u32[72,128]{1,0:T(1,128)}', space=vmem, size = 0x9000, scoped, tag = 'internal scratch']
  #allocation2 [shape = 'f32[64,1]{1,0:T(8,128)}', space=vmem, size = 0x8000, scoped, tag = 'scratch operand']
  %s0 = inlined_call_operand.vmem [shape: f32[2,64,256], index: 0, kind: input, shape index: {}]
  %s1 = inlined_call_operand.vmem [shape: f32[4,64], index: 1, kind: input, shape index: {}]
  %s2 = inlined_call_operand.vmem [shape: f32[64,4], index: 2, kind: input, shape index: {}]
  %s3 = inlined_call_operand.vmem [shape: f32[2,64,256], index: 3, kind: output, shape index: {}]
  %s4 = sld [smem:[#allocation0]]
  $region57: #{se_layer_forward.1} parent=0
    _
  %s6 = ssub.s32 1, %s4
  %s7 = scalar_select 0, %s6, %s4
  loop: start=0, step=1, limit=4
  $region2: #{se_layer_forward.1} parent=0 // loop_pre_header
    _
  $region3: #{se_layer_forward.1} parent=0 // loop_header
    %s9 = sphi 0, %s13
    %p10 = scmp.ge.s32.totalorder %s9, 4
    %s16 = sphi 0, %s28
    %s17 = sphi 0, %s24
    %s18 = sphi 0, %s16
    %s19 = sphi 0, %s17
    %s20 = sphi 0, %s18
    %s21 = sphi 0, %s19
    %s33 = sphi 0, %s35
    %s36 = sphi 0, %s33
    %s37 = sphi 0, %s36
    %s53 = sphi 0, %s37
    %s57 = sphi 0, %s57
    %s59 = sphi 0, %s57
    %s60 = sphi 0, %s59
    %s74 = sphi 0, %s60
    %s78 = sphi 0, %s78
    %s80 = sphi 0, %s78
    %s81 = sphi 0, %s80
    %s95 = sphi 0, %s81
    %s101 = sphi 0, %s103
    %s104 = sphi 0, %s101
    %s105 = sphi 0, %s104
    %s121 = sphi 0, %s105
  $region4: #{se_layer_forward.1} parent=0 // loop_header_branch
    %12 = sbr.rel (%p10) target = $region8
  $region5: #{se_layer_forward.1} parent=0 // loop_body
    %s14 = ssub.s32 %s9, 1
    %s15 = ssub.s32 %s9, 2
    %s22 = sadd.s32 1, %s17
    %p23 = scmp.ge.s32.totalorder %s22, 1
    %s24 = scalar_select %p23, 0, %s22
    %s25 = sadd.s32 1, %s16
    %s26 = scalar_select %p23, %s25, %s16
    %p27 = scmp.ge.s32.totalorder %s26, 2
    %s28 = scalar_select %p27, 0, %s26
    %s29 = ssub.s32 %s16, %s28
    %s30 = ssub.s32 %s17, %s24
    %s31 = sor.u32 %s29, %s30
    %p32 = scmp.eq.s32.totalorder %s31, 0
    %s34 = sadd.s32 %s33, 1
    %s35 = scalar_select %p32, %s33, %s34
    %p38 = pneg %p32
    %p39 = scmp.eq.s32.totalorder %s9, 1
    %p40 = por %p38, %p39
    %p41 = scmp.ne.s32.totalorder %s33, %s36
    %p42 = scmp.eq.s32.totalorder %s9, 0
    %p43 = por %p41, %p42
    %p44 = scmp.ne.s32.totalorder %s33, %s36
    %p45 = scmp.eq.s32.totalorder %s14, 1
    %p46 = por %p44, %p45
    %p47 = scmp.ne.s32.totalorder %s36, %s37
    %p48 = scmp.eq.s32.totalorder %s14, 0
    %p49 = por %p47, %p48
    %p50 = scmp.ne.s32.totalorder %s36, %s37
    %p51 = scmp.eq.s32.totalorder %s15, 1
    %p52 = por %p50, %p51
    %p54 = scmp.ne.s32.totalorder %s37, %s53
    %p55 = scmp.eq.s32.totalorder %s15, 0
    %p56 = por %p54, %p55
    %s58 = sadd.s32 %s57, 1
    %p61 = scmp.eq.s32.totalorder %s9, 1
    %p62 = scmp.ne.s32.totalorder %s57, %s59
    %p63 = scmp.eq.s32.totalorder %s9, 0
    %p64 = por %p62, %p63
    %p65 = scmp.ne.s32.totalorder %s57, %s59
    %p66 = scmp.eq.s32.totalorder %s14, 1
    %p67 = por %p65, %p66
    %p68 = scmp.ne.s32.totalorder %s59, %s60
    %p69 = scmp.eq.s32.totalorder %s14, 0
    %p70 = por %p68, %p69
    %p71 = scmp.ne.s32.totalorder %s59, %s60
    %p72 = scmp.eq.s32.totalorder %s15, 1
    %p73 = por %p71, %p72
    %p75 = scmp.ne.s32.totalorder %s60, %s74
    %p76 = scmp.eq.s32.totalorder %s15, 0
    %p77 = por %p75, %p76
    %s79 = sadd.s32 %s78, 1
    %p82 = scmp.eq.s32.totalorder %s9, 1
    %p83 = scmp.ne.s32.totalorder %s78, %s80
    %p84 = scmp.eq.s32.totalorder %s9, 0
    %p85 = por %p83, %p84
    %p86 = scmp.ne.s32.totalorder %s78, %s80
    %p87 = scmp.eq.s32.totalorder %s14, 1
    %p88 = por %p86, %p87
    %p89 = scmp.ne.s32.totalorder %s80, %s81
    %p90 = scmp.eq.s32.totalorder %s14, 0
    %p91 = por %p89, %p90
    %p92 = scmp.ne.s32.totalorder %s80, %s81
    %p93 = scmp.eq.s32.totalorder %s15, 1
    %p94 = por %p92, %p93
    %p96 = scmp.ne.s32.totalorder %s81, %s95
    %p97 = scmp.eq.s32.totalorder %s15, 0
    %p98 = por %p96, %p97
    %s99 = ssub.s32 %s16, %s28
    %p100 = scmp.eq.s32.totalorder %s99, 0
    %s102 = sadd.s32 %s101, 1
    %s103 = scalar_select %p100, %s101, %s102
    %p106 = pneg %p100
    %p107 = scmp.eq.s32.totalorder %s9, 1
    %p108 = por %p106, %p107
    %p109 = scmp.ne.s32.totalorder %s101, %s104
    %p110 = scmp.eq.s32.totalorder %s9, 0
    %p111 = por %p109, %p110
    %p112 = scmp.ne.s32.totalorder %s101, %s104
    %p113 = scmp.eq.s32.totalorder %s14, 1
    %p114 = por %p112, %p113
    %p115 = scmp.ne.s32.totalorder %s104, %s105
    %p116 = scmp.eq.s32.totalorder %s14, 0
    %p117 = por %p115, %p116
    %p118 = scmp.ne.s32.totalorder %s104, %s105
    %p119 = scmp.eq.s32.totalorder %s15, 1
    %p120 = por %p118, %p119
    %p122 = scmp.ne.s32.totalorder %s105, %s121
    %p123 = scmp.eq.s32.totalorder %s15, 0
    %p124 = por %p122, %p123
    %p125 = scmp.le.s32.totalorder 1, %s9
    %p126 = scmp.lt.s32.totalorder %s9, 3
    %p127 = pnand %p125, %p126
    %p128 = pneg %p127
    // Predicated region
    $region9: #{se_layer_forward.1} parent=5 // pred_check
      _
    $region10: #{se_layer_forward.1} parent=5 // pred_check_branch
      %130 = sbr.rel (%p127) target = $region12
    $region11: #{se_layer_forward.1} parent=5 // pred_region
      %s131 = ssub.s32 %s9, 1
      // Predicated region
      $region13: #{se_layer_forward.1} parent=11 // pred_check
        %p132 = pneg %p70
      $region14: #{se_layer_forward.1} parent=11 // pred_check_branch
        %134 = sbr.rel (%p132) target = $region16
      $region15: #{se_layer_forward.1} parent=11 // pred_region
        _
      $region16: #{se_layer_forward.1} parent=11 // pred_fallthru
        _
      // Predicated region
      $region17: #{se_layer_forward.1} parent=11 // pred_check
        %p135 = pneg %p91
      $region18: #{se_layer_forward.1} parent=11 // pred_check_branch
        %137 = sbr.rel (%p135) target = $region20
      $region19: #{se_layer_forward.1} parent=11 // pred_region
        _
      $region20: #{se_layer_forward.1} parent=11 // pred_fallthru
        _
    $region12: #{se_layer_forward.1} parent=5 // pred_fallthru
      _
    %p138 = scmp.lt.s32.totalorder %s9, 2
    // Predicated region
    $region21: #{se_layer_forward.1} parent=5 // pred_check
      %p139 = pneg %p138
    $region22: #{se_layer_forward.1} parent=5 // pred_check_branch
      %141 = sbr.rel (%p139) target = $region24
    $region23: #{se_layer_forward.1} parent=5 // pred_region
      // Predicated region
      $region25: #{se_layer_forward.1} parent=23 // pred_check
        %p142 = pneg %p43
      $region26: #{se_layer_forward.1} parent=23 // pred_check_branch
        %144 = sbr.rel (%p142) target = $region28
      $region27: #{se_layer_forward.1} parent=23 // pred_region
        %s145 = smul.u32 2, %s17
        %p146 = scmp.lt.s32.totalorder %s16, 1
        %s147 = scalar_select %p146, %s16, 1
        %p148 = scmp.lt.s32.totalorder %s145, 1
        %s149 = scalar_select %p148, %s145, 1
        %s150 = smul.addr %s147, 16
        %s151 = sadd.s32 %s149, %s150
        %s152 = smul.addr %s151, 8
        %s153 = scalar_lea.vmem %s0, %s152
        %s154 = smul.u32 2, %s17
      $region28: #{se_layer_forward.1} parent=23 // pred_fallthru
        _
    $region24: #{se_layer_forward.1} parent=5 // pred_fallthru
      _
    %p155 = scmp.le.s32.totalorder 1, %s9
    %p156 = scmp.lt.s32.totalorder %s9, 3
    %p157 = pnand %p155, %p156
    %p158 = pneg %p157
    // Predicated region
    $region29: #{se_layer_forward.1} parent=5 // pred_check
      _
    $region30: #{se_layer_forward.1} parent=5 // pred_check_branch
      %160 = sbr.rel (%p157) target = $region32
    $region31: #{se_layer_forward.1} parent=5 // pred_region
      %s161 = ssub.s32 %s9, 1
      %s162 = smul.u32 2, %s19
      %p163 = scmp.lt.s32.totalorder %s18, 1
      %s164 = scalar_select %p163, %s18, 1
      %p165 = scmp.lt.s32.totalorder %s162, 1
      %s166 = scalar_select %p165, %s162, 1
      %s167 = smul.addr %s164, 16
      %s168 = sadd.s32 %s166, %s167
      %s169 = smul.addr %s168, 8
      %s170 = scalar_lea.vmem %s0, %s169
      %p171 = pneg %p49
      %p172 = pneg %p46
      %p173 = pneg %p70
      %p174 = pneg %p67
      %p175 = pneg %p91
      %p176 = pneg %p88
      %p177 = pneg %p117
      %p178 = pneg %p114
      %p179 = scmp.lt.s32.totalorder %s18, 1
      %s180 = scalar_select %p179, %s18, 1
      %s181 = smul.addr %s180, 16
      %s182 = smul.addr %s181, 8
      %s183 = scalar_lea.vmem %s3, %s182
      %s184 = smul.u32 2, %s19
      %p185 = scmp.lt.s32.totalorder %s18, 1
      %s186 = scalar_select %p185, %s18, 1
      %p187 = scmp.lt.s32.totalorder %s184, 1
      %s188 = scalar_select %p187, %s184, 1
      %s189 = smul.addr %s186, 16
      %s190 = sadd.s32 %s188, %s189
      %s191 = smul.addr %s190, 8
      %s192 = scalar_lea.vmem %s0, %s191
      %s193 = smul.u32 2, %s19
      %p194 = scmp.lt.s32.totalorder %s18, 1
      %s195 = scalar_select %p194, %s18, 1
      %s196 = smul.addr %s195, 16
      %s197 = smul.addr %s196, 8
      %s198 = scalar_lea.vmem %s3, %s197
      %v199 = vld [vmem:[%s192] sm:$0xff]
      %v200 = vld [vmem:[%s192 + $0x8] sm:$0xff]
      %v201 = vld [vmem:[%s192 + $0x10] sm:$0xff]
      %v202 = vld [vmem:[%s192 + $0x18] sm:$0xff]
      %v203 = vld [vmem:[%s192 + $0x20] sm:$0xff]
      %v204 = vld [vmem:[%s192 + $0x28] sm:$0xff]
      %v205 = vld [vmem:[%s192 + $0x30] sm:$0xff]
      %v206 = vld [vmem:[%s192 + $0x38] sm:$0xff]
      %v207 = vld [vmem:[%s192 + $0x40] sm:$0xff]
      %v208 = vld [vmem:[%s192 + $0x48] sm:$0xff]
      %v209 = vld [vmem:[%s192 + $0x50] sm:$0xff]
      %v210 = vld [vmem:[%s192 + $0x58] sm:$0xff]
      %v211 = vld [vmem:[%s192 + $0x60] sm:$0xff]
      %v212 = vld [vmem:[%s192 + $0x68] sm:$0xff]
      %v213 = vld [vmem:[%s192 + $0x70] sm:$0xff]
      %v214 = vld [vmem:[%s192 + $0x78] sm:$0xff]
      %v215 = vadd.f32 %v199, %v200
      %216 = vadd.xlane.f32.xlu0 %v215
      %v217 = vpop.xlane.xlu0 %216
      %v218 = vadd.f32 %v201, %v202
      %219 = vadd.xlane.f32.xlu0 %v218
      %v220 = vpop.xlane.xlu0 %219
      %v221 = vadd.f32 %v203, %v204
      %222 = vadd.xlane.f32.xlu0 %v221
      %v223 = vpop.xlane.xlu0 %222
      %v224 = vadd.f32 %v205, %v206
      %225 = vadd.xlane.f32.xlu0 %v224
      %v226 = vpop.xlane.xlu0 %225
      %v227 = vadd.f32 %v207, %v208
      %228 = vadd.xlane.f32.xlu0 %v227
      %v229 = vpop.xlane.xlu0 %228
      %v230 = vadd.f32 %v209, %v210
      %231 = vadd.xlane.f32.xlu0 %v230
      %v232 = vpop.xlane.xlu0 %231
      %v233 = vadd.f32 %v211, %v212
      %234 = vadd.xlane.f32.xlu0 %v233
      %v235 = vpop.xlane.xlu0 %234
      %v236 = vadd.f32 %v213, %v214
      %237 = vadd.xlane.f32.xlu0 %v236
      %v238 = vpop.xlane.xlu0 %237
      %p239 = scmp.eq.s32.totalorder %s19, 0
      // Predicated region
      $region33: #{se_layer_forward.1} parent=31 // pred_check
        %p240 = pneg %p239
      $region34: #{se_layer_forward.1} parent=31 // pred_check_branch
        %242 = sbr.rel (%p240) target = $region36
      $region35: #{se_layer_forward.1} parent=31 // pred_region
        %vm243 = vcmask 7168
        %244 = vst.msk [vmem:[#allocation2] sm:$0xff] %vm243, %v217
        %245 = vst.msk [vmem:[#allocation2 + $0x8] sm:$0xff] %vm243, %v220
        %246 = vst.msk [vmem:[#allocation2 + $0x10] sm:$0xff] %vm243, %v223
        %247 = vst.msk [vmem:[#allocation2 + $0x18] sm:$0xff] %vm243, %v226
        %248 = vst.msk [vmem:[#allocation2 + $0x20] sm:$0xff] %vm243, %v229
        %249 = vst.msk [vmem:[#allocation2 + $0x28] sm:$0xff] %vm243, %v232
        %250 = vst.msk [vmem:[#allocation2 + $0x30] sm:$0xff] %vm243, %v235
        %251 = vst.msk [vmem:[#allocation2 + $0x38] sm:$0xff] %vm243, %v238
      $region36: #{se_layer_forward.1} parent=31 // pred_fallthru
        _
      %p252 = scmp.gt.s32.totalorder %s19, 0
      // Predicated region
      $region37: #{se_layer_forward.1} parent=31 // pred_check
        %p253 = pneg %p252
      $region38: #{se_layer_forward.1} parent=31 // pred_check_branch
        %255 = sbr.rel (%p253) target = $region40
      $region39: #{se_layer_forward.1} parent=31 // pred_region
        %v256 = vld [vmem:[#allocation2] sm:$0xff]
        %v257 = vld [vmem:[#allocation2 + $0x8] sm:$0xff]
        %v258 = vld [vmem:[#allocation2 + $0x10] sm:$0xff]
        %v259 = vld [vmem:[#allocation2 + $0x18] sm:$0xff]
        %v260 = vld [vmem:[#allocation2 + $0x20] sm:$0xff]
        %v261 = vld [vmem:[#allocation2 + $0x28] sm:$0xff]
        %v262 = vld [vmem:[#allocation2 + $0x30] sm:$0xff]
        %v263 = vld [vmem:[#allocation2 + $0x38] sm:$0xff]
        %v264 = vadd.f32 %v256, %v217
        %v265 = vadd.f32 %v257, %v220
        %v266 = vadd.f32 %v258, %v223
        %v267 = vadd.f32 %v259, %v226
        %v268 = vadd.f32 %v260, %v229
        %v269 = vadd.f32 %v261, %v232
        %v270 = vadd.f32 %v262, %v235
        %v271 = vadd.f32 %v263, %v238
        %vm272 = vcmask 7168
        %273 = vst.msk [vmem:[#allocation2] sm:$0xff] %vm272, %v264
        %274 = vst.msk [vmem:[#allocation2 + $0x8] sm:$0xff] %vm272, %v265
        %275 = vst.msk [vmem:[#allocation2 + $0x10] sm:$0xff] %vm272, %v266
        %276 = vst.msk [vmem:[#allocation2 + $0x18] sm:$0xff] %vm272, %v267
        %277 = vst.msk [vmem:[#allocation2 + $0x20] sm:$0xff] %vm272, %v268
        %278 = vst.msk [vmem:[#allocation2 + $0x28] sm:$0xff] %vm272, %v269
        %279 = vst.msk [vmem:[#allocation2 + $0x30] sm:$0xff] %vm272, %v270
        %280 = vst.msk [vmem:[#allocation2 + $0x38] sm:$0xff] %vm272, %v271
      $region40: #{se_layer_forward.1} parent=31 // pred_fallthru
        _
      %s281 = smul.u32 %s19, 256
      %s282 = sshra.s32 %s281, 7
      %s283 = sand.u32 %s281, 127
      %s284 = smul.addr %s282, 8
      %s285 = scalar_lea.vmem %s198, %s284
      %286 = vst [vmem:[%s285] sm:$0xff] %v199
      %287 = vst [vmem:[%s285 + $0x8] sm:$0xff] %v200
      %288 = vst [vmem:[%s285 + $0x10] sm:$0xff] %v201
      %289 = vst [vmem:[%s285 + $0x18] sm:$0xff] %v202
      %290 = vst [vmem:[%s285 + $0x20] sm:$0xff] %v203
      %291 = vst [vmem:[%s285 + $0x28] sm:$0xff] %v204
      %292 = vst [vmem:[%s285 + $0x30] sm:$0xff] %v205
      %293 = vst [vmem:[%s285 + $0x38] sm:$0xff] %v206
      %294 = vst [vmem:[%s285 + $0x40] sm:$0xff] %v207
      %295 = vst [vmem:[%s285 + $0x48] sm:$0xff] %v208
      %296 = vst [vmem:[%s285 + $0x50] sm:$0xff] %v209
      %297 = vst [vmem:[%s285 + $0x58] sm:$0xff] %v210
      %298 = vst [vmem:[%s285 + $0x60] sm:$0xff] %v211
      %299 = vst [vmem:[%s285 + $0x68] sm:$0xff] %v212
      %300 = vst [vmem:[%s285 + $0x70] sm:$0xff] %v213
      %301 = vst [vmem:[%s285 + $0x78] sm:$0xff] %v214
      // Predicated region
      $region41: #{se_layer_forward.1} parent=31 // pred_check
        %p302 = pneg %p239
      $region42: #{se_layer_forward.1} parent=31 // pred_check_branch
        %304 = sbr.rel (%p302) target = $region44
      $region43: #{se_layer_forward.1} parent=31 // pred_region
        %v305 = vld [vmem:[#allocation2] sm:$0xff]
        %v306 = vld [vmem:[#allocation2 + $0x8] sm:$0xff]
        %v307 = vld [vmem:[#allocation2 + $0x10] sm:$0xff]
        %v308 = vld [vmem:[#allocation2 + $0x18] sm:$0xff]
        %v309 = vld [vmem:[#allocation2 + $0x20] sm:$0xff]
        %v310 = vld [vmem:[#allocation2 + $0x28] sm:$0xff]
        %v311 = vld [vmem:[#allocation2 + $0x30] sm:$0xff]
        %v312 = vld [vmem:[#allocation2 + $0x38] sm:$0xff]
        %v313 = vmul.f32 %v305, 0.00390625
        %v314 = vmul.f32 %v306, 0.00390625
        %v315 = vmul.f32 %v307, 0.00390625
        %v316 = vmul.f32 %v308, 0.00390625
        %v317 = vmul.f32 %v309, 0.00390625
        %v318 = vmul.f32 %v310, 0.00390625
        %v319 = vmul.f32 %v311, 0.00390625
        %v320 = vmul.f32 %v312, 0.00390625
        %v321 = vld [vmem:[%s1] sm:$0xf]
        %v322 = vld [vmem:[%s2] sm:$0xff]
        %v323 = vld [vmem:[%s2 + $0x8] sm:$0xff]
        %v324 = vld [vmem:[%s2 + $0x10] sm:$0xff]
        %v325 = vld [vmem:[%s2 + $0x18] sm:$0xff]
        %v326 = vld [vmem:[%s2 + $0x20] sm:$0xff]
        %v327 = vld [vmem:[%s2 + $0x28] sm:$0xff]
        %v328 = vld [vmem:[%s2 + $0x30] sm:$0xff]
        %v329 = vld [vmem:[%s2 + $0x38] sm:$0xff]
        %vm330 = vcmask 523264
        %v332 = vsel %vm330, %v321, 0
        %334 = vmatpush.msra.mxu0 0.0
        %335 = vmatpush.msra.mxu0 0.0
        %336 = vmatpush.msra.mxu0 0.0
        %337 = vmatpush.msra.mxu0 0.0
        %338 = vmatpush.msra.mxu0 0.0
        %339 = vmatpush.msra.mxu0 0.0
        %340 = vmatpush.msra.mxu0 0.0
        %341 = vmatpush.msra.mxu0 0.0
        %342 = vmatpush.msra.mxu0 %v320
        %343 = vmatpush.msra.mxu0 %v319
        %344 = vmatpush.msra.mxu0 %v318
        %345 = vmatpush.msra.mxu0 %v317
        %346 = vmatpush.msra.mxu0 %v316
        %347 = vmatpush.msra.mxu0 %v315
        %348 = vmatpush.msra.mxu0 %v314
        %349 = vmatpush.msra.mxu0 %v313
        %350 = vmatmul.f32.gmra.mxu0 %v332
        %v351 = vpop.f32.mrf.mxu0
        %v352 = vadd.f32 0.0, %v351
        %353 = vdwg.mxu0
        %v354 = vmax.f32 %v352, 0.0
        %vm355 = vcmask 31744
        %v357 = vsel %vm355, %v322, 0
        %v360 = vsel %vm355, %v323, 0
        %v363 = vsel %vm355, %v324, 0
        %v366 = vsel %vm355, %v325, 0
        %v369 = vsel %vm355, %v326, 0
        %v372 = vsel %vm355, %v327, 0
        %v375 = vsel %vm355, %v328, 0
        %v378 = vsel %vm355, %v329, 0
        %vm380 = vcmask 1043456
        %v382 = vsel %vm380, %v354, 0
        %384 = vmatpush.msra.mxu0 0.0
        %385 = vmatpush.msra.mxu0 0.0
        %386 = vmatpush.msra.mxu0 0.0
        %387 = vmatpush.msra.mxu0 0.0
        %388 = vmatpush.msra.mxu0 0.0
        %389 = vmatpush.msra.mxu0 0.0
        %390 = vmatpush.msra.mxu0 0.0
        %391 = vmatpush.msra.mxu0 0.0
        %392 = vmatpush.msra.mxu0 0.0
        %393 = vmatpush.msra.mxu0 0.0
        %394 = vmatpush.msra.mxu0 0.0
        %395 = vmatpush.msra.mxu0 0.0
        %396 = vmatpush.msra.mxu0 0.0
        %397 = vmatpush.msra.mxu0 0.0
        %398 = vmatpush.msra.mxu0 0.0
        %399 = vmatpush.msra.mxu0 %v382
        %400 = vmatmul.f32.gmra.mxu0 %v357
        %v401 = vpop.f32.mrf.mxu0
        %v402 = vadd.f32 0.0, %v401
        %403 = vmatmul.f32.gmra.mxu0 %v360
        %v404 = vpop.f32.mrf.mxu0
        %v405 = vadd.f32 0.0, %v404
        %406 = vmatmul.f32.gmra.mxu0 %v363
        %v407 = vpop.f32.mrf.mxu0
        %v408 = vadd.f32 0.0, %v407
        %409 = vmatmul.f32.gmra.mxu0 %v366
        %v410 = vpop.f32.mrf.mxu0
        %v411 = vadd.f32 0.0, %v410
        %412 = vmatmul.f32.gmra.mxu0 %v369
        %v413 = vpop.f32.mrf.mxu0
        %v414 = vadd.f32 0.0, %v413
        %415 = vmatmul.f32.gmra.mxu0 %v372
        %v416 = vpop.f32.mrf.mxu0
        %v417 = vadd.f32 0.0, %v416
        %418 = vmatmul.f32.gmra.mxu0 %v375
        %v419 = vpop.f32.mrf.mxu0
        %v420 = vadd.f32 0.0, %v419
        %421 = vmatmul.f32.gmra.mxu0 %v378
        %v422 = vpop.f32.mrf.mxu0
        %v423 = vadd.f32 0.0, %v422
        %424 = vdwg.mxu0
        %v425 = vsub.f32 0.0, %v402
        %v426 = vsub.f32 0.0, %v405
        %v427 = vsub.f32 0.0, %v408
        %v428 = vsub.f32 0.0, %v411
        %v429 = vsub.f32 0.0, %v414
        %v430 = vsub.f32 0.0, %v417
        %v431 = vsub.f32 0.0, %v420
        %v432 = vsub.f32 0.0, %v423
        %v433 = vmul.f32 %v425, 1.442695
        %v434 = vpow.pop %v433
        %v435 = vmul.f32 %v426, 1.442695
        %v436 = vpow.pop %v435
        %v437 = vmul.f32 %v427, 1.442695
        %v438 = vpow.pop %v437
        %v439 = vmul.f32 %v428, 1.442695
        %v440 = vpow.pop %v439
        %v441 = vmul.f32 %v429, 1.442695
        %v442 = vpow.pop %v441
        %v443 = vmul.f32 %v430, 1.442695
        %v444 = vpow.pop %v443
        %v445 = vmul.f32 %v431, 1.442695
        %v446 = vpow.pop %v445
        %v447 = vmul.f32 %v432, 1.442695
        %v448 = vpow.pop %v447
        %v449 = vadd.f32 %v434, 1.0
        %v450 = vadd.f32 %v436, 1.0
        %v451 = vadd.f32 %v438, 1.0
        %v452 = vadd.f32 %v440, 1.0
        %v453 = vadd.f32 %v442, 1.0
        %v454 = vadd.f32 %v444, 1.0
        %v455 = vadd.f32 %v446, 1.0
        %v456 = vadd.f32 %v448, 1.0
        %v457 = vrcp.pop %v449
        %v458 = vmul.f32 %v449, %v457
        %v459 = vsub.f32 1.0, %v458
        %v460 = vmul.f32 %v457, %v459
        %v461 = vadd.f32 %v457, %v460
        %vm462 = vweird.f32 %v449
        %vm463 = vweird.f32 %v457
        %vm464 = vmor %vm462, %vm463
        %v465 = vsel %vm464, %v457, %v461
        %v466 = vand.u32 2147483647, %v449
        %vm467 = vcmp.eq.f32.partialorder %v466, 8.507059e+37
        %v468 = vand.u32 %v449, 2147483648
        %v469 = vor.u32 1.1754944e-38, %v468
        %v470 = vsel %vm467, %v469, %v465
        %v471 = vmul.f32 1.0, %v470
        %v472 = vrcp.pop %v450
        %v473 = vmul.f32 %v450, %v472
        %v474 = vsub.f32 1.0, %v473
        %v475 = vmul.f32 %v472, %v474
        %v476 = vadd.f32 %v472, %v475
        %vm477 = vweird.f32 %v450
        %vm478 = vweird.f32 %v472
        %vm479 = vmor %vm477, %vm478
        %v480 = vsel %vm479, %v472, %v476
        %v481 = vand.u32 2147483647, %v450
        %vm482 = vcmp.eq.f32.partialorder %v481, 8.507059e+37
        %v483 = vand.u32 %v450, 2147483648
        %v484 = vor.u32 1.1754944e-38, %v483
        %v485 = vsel %vm482, %v484, %v480
        %v486 = vmul.f32 1.0, %v485
        %v487 = vrcp.pop %v451
        %v488 = vmul.f32 %v451, %v487
        %v489 = vsub.f32 1.0, %v488
        %v490 = vmul.f32 %v487, %v489
        %v491 = vadd.f32 %v487, %v490
        %vm492 = vweird.f32 %v451
        %vm493 = vweird.f32 %v487
        %vm494 = vmor %vm492, %vm493
        %v495 = vsel %vm494, %v487, %v491
        %v496 = vand.u32 2147483647, %v451
        %vm497 = vcmp.eq.f32.partialorder %v496, 8.507059e+37
        %v498 = vand.u32 %v451, 2147483648
        %v499 = vor.u32 1.1754944e-38, %v498
        %v500 = vsel %vm497, %v499, %v495
        %v501 = vmul.f32 1.0, %v500
        %v502 = vrcp.pop %v452
        %v503 = vmul.f32 %v452, %v502
        %v504 = vsub.f32 1.0, %v503
        %v505 = vmul.f32 %v502, %v504
        %v506 = vadd.f32 %v502, %v505
        %vm507 = vweird.f32 %v452
        %vm508 = vweird.f32 %v502
        %vm509 = vmor %vm507, %vm508
        %v510 = vsel %vm509, %v502, %v506
        %v511 = vand.u32 2147483647, %v452
        %vm512 = vcmp.eq.f32.partialorder %v511, 8.507059e+37
        %v513 = vand.u32 %v452, 2147483648
        %v514 = vor.u32 1.1754944e-38, %v513
        %v515 = vsel %vm512, %v514, %v510
        %v516 = vmul.f32 1.0, %v515
        %v517 = vrcp.pop %v453
        %v518 = vmul.f32 %v453, %v517
        %v519 = vsub.f32 1.0, %v518
        %v520 = vmul.f32 %v517, %v519
        %v521 = vadd.f32 %v517, %v520
        %vm522 = vweird.f32 %v453
        %vm523 = vweird.f32 %v517
        %vm524 = vmor %vm522, %vm523
        %v525 = vsel %vm524, %v517, %v521
        %v526 = vand.u32 2147483647, %v453
        %vm527 = vcmp.eq.f32.partialorder %v526, 8.507059e+37
        %v528 = vand.u32 %v453, 2147483648
        %v529 = vor.u32 1.1754944e-38, %v528
        %v530 = vsel %vm527, %v529, %v525
        %v531 = vmul.f32 1.0, %v530
        %v532 = vrcp.pop %v454
        %v533 = vmul.f32 %v454, %v532
        %v534 = vsub.f32 1.0, %v533
        %v535 = vmul.f32 %v532, %v534
        %v536 = vadd.f32 %v532, %v535
        %vm537 = vweird.f32 %v454
        %vm538 = vweird.f32 %v532
        %vm539 = vmor %vm537, %vm538
        %v540 = vsel %vm539, %v532, %v536
        %v541 = vand.u32 2147483647, %v454
        %vm542 = vcmp.eq.f32.partialorder %v541, 8.507059e+37
        %v543 = vand.u32 %v454, 2147483648
        %v544 = vor.u32 1.1754944e-38, %v543
        %v545 = vsel %vm542, %v544, %v540
        %v546 = vmul.f32 1.0, %v545
        %v547 = vrcp.pop %v455
        %v548 = vmul.f32 %v455, %v547
        %v549 = vsub.f32 1.0, %v548
        %v550 = vmul.f32 %v547, %v549
        %v551 = vadd.f32 %v547, %v550
        %vm552 = vweird.f32 %v455
        %vm553 = vweird.f32 %v547
        %vm554 = vmor %vm552, %vm553
        %v555 = vsel %vm554, %v547, %v551
        %v556 = vand.u32 2147483647, %v455
        %vm557 = vcmp.eq.f32.partialorder %v556, 8.507059e+37
        %v558 = vand.u32 %v455, 2147483648
        %v559 = vor.u32 1.1754944e-38, %v558
        %v560 = vsel %vm557, %v559, %v555
        %v561 = vmul.f32 1.0, %v560
        %v562 = vrcp.pop %v456
        %v563 = vmul.f32 %v456, %v562
        %v564 = vsub.f32 1.0, %v563
        %v565 = vmul.f32 %v562, %v564
        %v566 = vadd.f32 %v562, %v565
        %vm567 = vweird.f32 %v456
        %vm568 = vweird.f32 %v562
        %vm569 = vmor %vm567, %vm568
        %v570 = vsel %vm569, %v562, %v566
        %v571 = vand.u32 2147483647, %v456
        %vm572 = vcmp.eq.f32.partialorder %v571, 8.507059e+37
        %v573 = vand.u32 %v456, 2147483648
        %v574 = vor.u32 1.1754944e-38, %v573
        %v575 = vsel %vm572, %v574, %v570
        %v576 = vmul.f32 1.0, %v575
        %v577 = vld [vmem:[%s198] sm:$0xff]
        %v578 = vld [vmem:[%s198 + $0x8] sm:$0xff]
        %v579 = vld [vmem:[%s198 + $0x10] sm:$0xff]
        %v580 = vld [vmem:[%s198 + $0x18] sm:$0xff]
        %v581 = vld [vmem:[%s198 + $0x20] sm:$0xff]
        %v582 = vld [vmem:[%s198 + $0x28] sm:$0xff]
        %v583 = vld [vmem:[%s198 + $0x30] sm:$0xff]
        %v584 = vld [vmem:[%s198 + $0x38] sm:$0xff]
        %v585 = vld [vmem:[%s198 + $0x40] sm:$0xff]
        %v586 = vld [vmem:[%s198 + $0x48] sm:$0xff]
        %v587 = vld [vmem:[%s198 + $0x50] sm:$0xff]
        %v588 = vld [vmem:[%s198 + $0x58] sm:$0xff]
        %v589 = vld [vmem:[%s198 + $0x60] sm:$0xff]
        %v590 = vld [vmem:[%s198 + $0x68] sm:$0xff]
        %v591 = vld [vmem:[%s198 + $0x70] sm:$0xff]
        %v592 = vld [vmem:[%s198 + $0x78] sm:$0xff]
        %594 = vset.pattern.permute.xlu0 0
        %595 = vperm.xlu0 %594, %v471
        %v596 = vpop.permute.xlu0 %595
        %599 = vset.pattern.permute.xlu0 0
        %600 = vperm.xlu0 %599, %v486
        %v601 = vpop.permute.xlu0 %600
        %604 = vset.pattern.permute.xlu0 0
        %605 = vperm.xlu0 %604, %v501
        %v606 = vpop.permute.xlu0 %605
        %609 = vset.pattern.permute.xlu0 0
        %610 = vperm.xlu0 %609, %v516
        %v611 = vpop.permute.xlu0 %610
        %614 = vset.pattern.permute.xlu0 0
        %615 = vperm.xlu0 %614, %v531
        %v616 = vpop.permute.xlu0 %615
        %619 = vset.pattern.permute.xlu0 0
        %620 = vperm.xlu0 %619, %v546
        %v621 = vpop.permute.xlu0 %620
        %624 = vset.pattern.permute.xlu0 0
        %625 = vperm.xlu0 %624, %v561
        %v626 = vpop.permute.xlu0 %625
        %629 = vset.pattern.permute.xlu0 0
        %630 = vperm.xlu0 %629, %v576
        %v631 = vpop.permute.xlu0 %630
        %v633 = vmul.f32 %v577, %v596
        %v634 = vmul.f32 %v578, %v596
        %v635 = vmul.f32 %v579, %v601
        %v636 = vmul.f32 %v580, %v601
        %v637 = vmul.f32 %v581, %v606
        %v638 = vmul.f32 %v582, %v606
        %v639 = vmul.f32 %v583, %v611
        %v640 = vmul.f32 %v584, %v611
        %v641 = vmul.f32 %v585, %v616
        %v642 = vmul.f32 %v586, %v616
        %v643 = vmul.f32 %v587, %v621
        %v644 = vmul.f32 %v588, %v621
        %v645 = vmul.f32 %v589, %v626
        %v646 = vmul.f32 %v590, %v626
        %v647 = vmul.f32 %v591, %v631
        %v648 = vmul.f32 %v592, %v631
        %649 = vst [vmem:[%s198] sm:$0xff] %v633
        %650 = vst [vmem:[%s198 + $0x8] sm:$0xff] %v634
        %651 = vst [vmem:[%s198 + $0x10] sm:$0xff] %v635
        %652 = vst [vmem:[%s198 + $0x18] sm:$0xff] %v636
        %653 = vst [vmem:[%s198 + $0x20] sm:$0xff] %v637
        %654 = vst [vmem:[%s198 + $0x28] sm:$0xff] %v638
        %655 = vst [vmem:[%s198 + $0x30] sm:$0xff] %v639
        %656 = vst [vmem:[%s198 + $0x38] sm:$0xff] %v640
        %657 = vst [vmem:[%s198 + $0x40] sm:$0xff] %v641
        %658 = vst [vmem:[%s198 + $0x48] sm:$0xff] %v642
        %659 = vst [vmem:[%s198 + $0x50] sm:$0xff] %v643
        %660 = vst [vmem:[%s198 + $0x58] sm:$0xff] %v644
        %661 = vst [vmem:[%s198 + $0x60] sm:$0xff] %v645
        %662 = vst [vmem:[%s198 + $0x68] sm:$0xff] %v646
        %663 = vst [vmem:[%s198 + $0x70] sm:$0xff] %v647
        %664 = vst [vmem:[%s198 + $0x78] sm:$0xff] %v648
      $region44: #{se_layer_forward.1} parent=31 // pred_fallthru
        _
      %p665 = scmp.lt.s32.totalorder %s18, 1
      %s666 = scalar_select %p665, %s18, 1
      %s667 = smul.addr %s666, 16
      %s668 = smul.addr %s667, 8
      %s669 = scalar_lea.vmem %s3, %s668
      // Predicated region
      $region45: #{se_layer_forward.1} parent=31 // pred_check
        %p670 = pneg %p114
      $region46: #{se_layer_forward.1} parent=31 // pred_check_branch
        %672 = sbr.rel (%p670) target = $region48
      $region47: #{se_layer_forward.1} parent=31 // pred_region
        _
      $region48: #{se_layer_forward.1} parent=31 // pred_fallthru
        _
    $region32: #{se_layer_forward.1} parent=5 // pred_fallthru
      _
    %p673 = scmp.le.s32.totalorder 2, %s9
    // Predicated region
    $region49: #{se_layer_forward.1} parent=5 // pred_check
      %p674 = pneg %p673
    $region50: #{se_layer_forward.1} parent=5 // pred_check_branch
      %676 = sbr.rel (%p674) target = $region52
    $region51: #{se_layer_forward.1} parent=5 // pred_region
      %s677 = ssub.s32 %s9, 2
      // Predicated region
      $region53: #{se_layer_forward.1} parent=51 // pred_check
        %p678 = pneg %p120
      $region54: #{se_layer_forward.1} parent=51 // pred_check_branch
        %680 = sbr.rel (%p678) target = $region56
      $region55: #{se_layer_forward.1} parent=51 // pred_region
        %p681 = scmp.lt.s32.totalorder %s20, 1
        %s682 = scalar_select %p681, %s20, 1
        %s683 = smul.addr %s682, 16
        %s684 = smul.addr %s683, 8
        %s685 = scalar_lea.vmem %s3, %s684
      $region56: #{se_layer_forward.1} parent=51 // pred_fallthru
        _
    $region52: #{se_layer_forward.1} parent=5 // pred_fallthru
      _
  $region6: #{se_layer_forward.1} parent=0 // loop_footer
    %s13 = sadd.s32 1, %s9
  $region7: #{se_layer_forward.1} parent=0 // loop_footer_branch
    %8 = sbr.rel target = $region3
  $region8: #{se_layer_forward.1} parent=0 // loop_exit
    _

</llo_original>
